<compile_context>
chip_gen: v7x
topology: tpu7x:2x2x1
jax: 0.10.0
libtpu: 0.0.40
codegen_flags: <defaults>
</compile_context>

<pallas_src>
import functools
import math

import jax
import jax.numpy as jnp
from jax import lax
from jax.experimental import pallas as pl
from jax.experimental.pallas import tpu as pltpu

_MiB = 1024 * 1024


# --------------------------------------------------------------------------
# Kernels
# --------------------------------------------------------------------------
def _layernorm_kernel(x_ref, g_ref, b_ref, o_ref, *, eps, inv_d):
    # x_ref: (TILE_N, D)   g_ref/b_ref: (1, D)   o_ref: (TILE_N, D)
    x = x_ref[...].astype(jnp.float32)
    s = jnp.sum(x, axis=-1, keepdims=True)
    ss = jnp.sum(x * x, axis=-1, keepdims=True)
    mean = s * inv_d
    var = jnp.maximum(ss * inv_d - mean * mean, 0.0)  # guard cancellation
    inv_std = lax.rsqrt(var + eps)
    g = g_ref[...].astype(jnp.float32)
    b = b_ref[...].astype(jnp.float32)
    o_ref[...] = ((x - mean) * inv_std * g + b).astype(o_ref.dtype)


def _ln_stats_kernel(x_ref, mean_ref, rstd_ref, *, eps, inv_d, d, tile_d):
    # Pass 1 of the chunked-D path.  mean_ref / rstd_ref double as running
    # sum / sum-of-squares accumulators (resident across the D-chunk axis).
    k = pl.program_id(1)
    x = x_ref[...].astype(jnp.float32)
    cols = k * tile_d + lax.broadcasted_iota(jnp.int32, x.shape, 1)
    x = jnp.where(cols < d, x, 0.0)  # mask padded tail chunk
    ps = jnp.sum(x, axis=-1, keepdims=True)
    pss = jnp.sum(x * x, axis=-1, keepdims=True)

    @pl.when(k == 0)
    def _():
        mean_ref[...] = ps
        rstd_ref[...] = pss

    @pl.when(k > 0)
    def _():
        mean_ref[...] += ps
        rstd_ref[...] += pss

    @pl.when(k == pl.num_programs(1) - 1)
    def _():
        s = mean_ref[...]
        ss = rstd_ref[...]
        m = s * inv_d
        var = jnp.maximum(ss * inv_d - m * m, 0.0)
        mean_ref[...] = m
        rstd_ref[...] = lax.rsqrt(var + eps)


def _ln_apply_kernel(x_ref, g_ref, b_ref, mean_ref, rstd_ref, o_ref):
    # Pass 2 of the chunked-D path.
    x = x_ref[...].astype(jnp.float32)
    g = g_ref[...].astype(jnp.float32)
    b = b_ref[...].astype(jnp.float32)
    y = (x - mean_ref[...]) * rstd_ref[...] * g + b
    o_ref[...] = y.astype(o_ref.dtype)


# --------------------------------------------------------------------------
# Tiling / hardware helpers
# --------------------------------------------------------------------------
def _vmem_physical_bytes() -> int:
    try:
        cap = getattr(pltpu.get_tpu_info(), "vmem_capacity_bytes", None)
        if cap:
            return int(cap)
    except Exception:
        pass
    kind = ""
    try:
        kind = jax.devices()[0].device_kind.lower()
    except Exception:
        pass
    if "v7" in kind or "7x" in kind:
        return 64 * _MiB
    return 128 * _MiB


def _row_axis_semantics(num_row_tiles: int):
    """CORE_PARALLEL on v7x (2 TCs/chip) when there is work to split."""
    kind = ""
    try:
        kind = jax.devices()[0].device_kind.lower()
    except Exception:
        pass
    core_par = getattr(pltpu, "CORE_PARALLEL", None)
    if core_par is not None and num_row_tiles > 1 and ("v7" in kind or "7x" in kind):
        return core_par
    return "parallel"


def _pick_tile_rows(n_rows, d, itemsize, work_budget_bytes, target_tile_bytes):
    # VMEM cost per row: 2x in + 2x out double-buffered blocks in x.dtype
    # plus ~3 tile-sized f32 temporaries from the in-kernel upcast.
    per_row_vmem = d * (4 * itemsize + 12)
    per_row_tile = max(1, d * itemsize)
    rows_by_budget = max(1, work_budget_bytes // per_row_vmem)
    rows_by_target = max(1, target_tile_bytes // per_row_tile)
    tile = min(rows_by_budget, rows_by_target)
    if tile >= n_rows:
        return n_rows                      # full extent: always legal
    tile = (tile // 8) * 8
    return max(tile, 8)                    # always a multiple of 8


def _pick_chunk_tiles(n_rows, d, itemsize, work_budget_bytes, target_tile_bytes,
                      chunk_d=None):
    tile_r = n_rows if n_rows <= 8 else 8
    if chunk_d is not None:
        tile_d = min(int(chunk_d), d)
        if tile_d < d:
            tile_d = max(128, (tile_d // 128) * 128)
        return tile_r, tile_d
    per_col_vmem = tile_r * (4 * itemsize + 12)
    cols_by_budget = max(128, work_budget_bytes // per_col_vmem)
    cols_by_target = max(128, target_tile_bytes // max(1, tile_r * itemsize))
    tile_d = min(cols_by_budget, cols_by_target)
    if tile_d >= d:
        return tile_r, d
    return tile_r, max(128, (tile_d // 128) * 128)


# --------------------------------------------------------------------------
# Wrapper
# --------------------------------------------------------------------------
def _layernorm_chunked(x_flat, g_flat, b_flat, eps, tile_r, tile_d, vmem_limit):
    N, D = x_flat.shape
    RT = pl.cdiv(N, tile_r)
    KD = pl.cdiv(D, tile_d)
    inv_d = 1.0 / float(D)

    stats_kernel = functools.partial(
        _ln_stats_kernel, eps=float(eps), inv_d=inv_d, d=D, tile_d=tile_d)

    mean, rstd = pl.pallas_call(
        stats_kernel,
        out_shape=(jax.ShapeDtypeStruct((N, 1), jnp.float32),
                   jax.ShapeDtypeStruct((N, 1), jnp.float32)),
        grid_spec=pltpu.PrefetchScalarGridSpec(
            num_scalar_prefetch=0,
            grid=(RT, KD),
            in_specs=[pl.BlockSpec((tile_r, tile_d), lambda i, k: (i, k))],
            out_specs=[pl.BlockSpec((tile_r, 1), lambda i, k: (i, 0)),
                       pl.BlockSpec((tile_r, 1), lambda i, k: (i, 0))],
        ),
        compiler_params=pltpu.CompilerParams(
            dimension_semantics=("parallel", "arbitrary"),
            vmem_limit_bytes=int(vmem_limit),
        ),
    )(x_flat)

    out = pl.pallas_call(
        _ln_apply_kernel,
        out_shape=jax.ShapeDtypeStruct((N, D), x_flat.dtype),
        grid_spec=pltpu.PrefetchScalarGridSpec(
            num_scalar_prefetch=0,
            grid=(RT, KD),
            in_specs=[
                pl.BlockSpec((tile_r, tile_d), lambda i, k: (i, k)),
                pl.BlockSpec((1, tile_d), lambda i, k: (0, k)),
                pl.BlockSpec((1, tile_d), lambda i, k: (0, k)),
                pl.BlockSpec((tile_r, 1), lambda i, k: (i, 0)),
                pl.BlockSpec((tile_r, 1), lambda i, k: (i, 0)),
            ],
            out_specs=pl.BlockSpec((tile_r, tile_d), lambda i, k: (i, k)),
        ),
        compiler_params=pltpu.CompilerParams(
            dimension_semantics=("parallel", "arbitrary"),
            vmem_limit_bytes=int(vmem_limit),
        ),
    )(x_flat, g_flat, b_flat, mean, rstd)
    return out


def layernorm_pallas(x, weight, bias, eps: float = 1e-5, *, chunk_d=None):
    """x: (N, *normalized_shape); weight/bias: normalized_shape (kept f32)."""
    orig_shape = x.shape
    N = int(x.shape[0])
    D = int(math.prod(x.shape[1:])) if x.ndim > 1 else 1

    x_flat = x.reshape(N, D)
    g_flat = jnp.asarray(weight, jnp.float32).reshape(1, D)
    b_flat = jnp.asarray(bias, jnp.float32).reshape(1, D)
    itemsize = x_flat.dtype.itemsize

    phys = _vmem_physical_bytes()
    vmem_limit = int(min(96 * _MiB, (3 * phys) // 4))     # 48 MiB on v7x
    gb_bytes = 4 * D * 4 * 2                               # gamma+beta, 2 bufs, f32
    work_budget = vmem_limit - gb_bytes - 4 * _MiB

    per_row_vmem = D * (4 * itemsize + 12)
    min_rows = N if N < 8 else 8

    if chunk_d is not None or work_budget < min_rows * per_row_vmem:
        # Large-D fallback: two passes, chunked over D.
        tile_r, tile_d = _pick_chunk_tiles(
            N, D, itemsize, max(work_budget, 8 * _MiB), 4 * _MiB, chunk_d)
        out = _layernorm_chunked(x_flat, g_flat, b_flat, eps, tile_r, tile_d,
                                 vmem_limit)
        return out.reshape(orig_shape)

    tile_n = _pick_tile_rows(N, D, itemsize, work_budget, 8 * _MiB)
    grid = (pl.cdiv(N, tile_n),)
    kernel = functools.partial(_layernorm_kernel, eps=float(eps),
                               inv_d=1.0 / float(D))

    def build(row_sem):
        return pl.pallas_call(
            kernel,
            out_shape=jax.ShapeDtypeStruct((N, D), x_flat.dtype),
            grid_spec=pltpu.PrefetchScalarGridSpec(
                num_scalar_prefetch=0,
                grid=grid,
                in_specs=[
                    pl.BlockSpec((tile_n, D), lambda i: (i, 0)),
                    pl.BlockSpec((1, D), lambda i: (0, 0)),
                    pl.BlockSpec((1, D), lambda i: (0, 0)),
                ],
                out_specs=pl.BlockSpec((tile_n, D), lambda i: (i, 0)),
            ),
            compiler_params=pltpu.CompilerParams(
                dimension_semantics=(row_sem,),
                vmem_limit_bytes=int(vmem_limit),
            ),
        )

    sem = _row_axis_semantics(grid[0])
    try:
        out = build(sem)(x_flat, g_flat, b_flat)
    except Exception:
        if sem == "parallel":
            raise
        out = build("parallel")(x_flat, g_flat, b_flat)
    return out.reshape(orig_shape)


class ModelNew:
    """LayerNorm over all dims except the first (batch), Pallas-backed."""

    def __init__(self, normalized_shape, eps: float = 1e-5):
        self.normalized_shape = tuple(normalized_shape)
        self.eps = eps
        self.weight = jnp.ones(self.normalized_shape, dtype=jnp.float32)
        self.bias = jnp.zeros(self.normalized_shape, dtype=jnp.float32)

    def __call__(self, x):
        return layernorm_pallas(x, self.weight, self.bias, self.eps)


# --------------------------------------------------------------------------
# Self-test
# --------------------------------------------------------------------------
def _ref_layernorm(x, w, b, eps):
    N = x.shape[0]
    xf = x.reshape(N, -1).astype(jnp.float32)
    mean = jnp.mean(xf, axis=-1, keepdims=True)
    var = jnp.maximum(jnp.mean(xf * xf, axis=-1, keepdims=True) - mean * mean, 0.0)
    y = (xf - mean) * lax.rsqrt(var + eps)
    y = y * jnp.asarray(w, jnp.float32).reshape(1, -1) \
          + jnp.asarray(b, jnp.float32).reshape(1, -1)
    return y.reshape(x.shape)


if __name__ == "__main__":
    key = jax.random.PRNGKey(0)
    k1, k2, k3, k4, k5 = jax.random.split(key, 5)
    eps = 1e-5

    # 1) Module with default (ones/zeros) affine params: (2, 4, 16, 16).
    N, C, H, W = 2, 4, 16, 16
    x = jax.random.normal(k1, (N, C, H, W), dtype=jnp.float32)
    model = ModelNew(normalized_shape=(C, H, W), eps=eps)
    y = jax.block_until_ready(model(x))
    ref = _ref_layernorm(x, model.weight, model.bias, eps)
    assert jnp.allclose(y, ref, atol=1e-4, rtol=1e-5), "module path mismatch"

    # 2) Non-trivial gamma/beta, single-pass path.
    w = jax.random.normal(k2, (C, H, W), dtype=jnp.float32)
    b = jax.random.normal(k3, (C, H, W), dtype=jnp.float32)
    y2 = jax.block_until_ready(layernorm_pallas(x, w, b, eps))
    ref2 = _ref_layernorm(x, w, b, eps)
    assert jnp.allclose(y2, ref2, atol=1e-4, rtol=1e-5), "affine path mismatch"

    # 3) Forced chunked-D path (D = 1024 split into 256-wide chunks).
    y3 = jax.block_until_ready(layernorm_pallas(x, w, b, eps, chunk_d=256))
    assert jnp.allclose(y3, ref2, atol=1e-4, rtol=1e-5), "chunked path mismatch"

    # 4) D not a multiple of 128 (D = 400): single-pass and masked chunked path.
    x4 = jax.random.normal(k4, (4, 4, 10, 10), dtype=jnp.float32)
    w4 = jax.random.normal(k5, (4, 10, 10), dtype=jnp.float32)
    b4 = jnp.zeros((4, 10, 10), dtype=jnp.float32)
    ref4 = _ref_layernorm(x4, w4, b4, eps)
    y4a = jax.block_until_ready(layernorm_pallas(x4, w4, b4, eps))
    y4b = jax.block_until_ready(layernorm_pallas(x4, w4, b4, eps, chunk_d=256))
    assert jnp.allclose(y4a, ref4, atol=1e-4, rtol=1e-5), "D=400 single mismatch"
    assert jnp.allclose(y4b, ref4, atol=1e-4, rtol=1e-5), "D=400 chunked mismatch"

    print("KERNEL_OK")
</pallas_src>

<mosaic_0001>
module attributes {stable_mosaic.version = 11 : i64} {
  func.func @_layernorm_kernel(%arg0: i32, %arg1: memref<2x1024xf32, #tpu.memory_space<vmem>>, %arg2: memref<1x1024xf32, #tpu.memory_space<vmem>>, %arg3: memref<1x1024xf32, #tpu.memory_space<vmem>>, %arg4: memref<2x1024xf32, #tpu.memory_space<vmem>>) attributes {dimension_semantics = [#tpu.dimension_semantics<parallel>], iteration_bounds = array<i64: 1>, scalar_prefetch = 0 : i64, scratch_operands = 0 : i64, tpu.core_type = #tpu.core_type<tc>, window_params = [{transform_indices = @transform_0, window_bounds = array<i64: 2, 1024>}, {pipeline_mode = #tpu.pipeline_mode<synchronous>, transform_indices = @transform_1, window_bounds = array<i64: 1, 1024>}, {pipeline_mode = #tpu.pipeline_mode<synchronous>, transform_indices = @transform_2, window_bounds = array<i64: 1, 1024>}, {transform_indices = @transform_3, window_bounds = array<i64: 2, 1024>}]} {
    %c0 = arith.constant 0 : index
    %c0_0 = arith.constant 0 : index
    %0 = vector.load %arg1[%c0, %c0_0] : memref<2x1024xf32, #tpu.memory_space<vmem>>, vector<2x1024xf32>
    %cst = arith.constant dense<0.000000e+00> : vector<2xf32>
    %1 = vector.multi_reduction <add>, %0, %cst [1] : vector<2x1024xf32> to vector<2xf32>
    %2 = vector.shape_cast %1 : vector<2xf32> to vector<2x1xf32>
    %3 = arith.mulf %0, %0 : vector<2x1024xf32>
    %cst_1 = arith.constant dense<0.000000e+00> : vector<2xf32>
    %4 = vector.multi_reduction <add>, %3, %cst_1 [1] : vector<2x1024xf32> to vector<2xf32>
    %5 = vector.shape_cast %4 : vector<2xf32> to vector<2x1xf32>
    %cst_2 = arith.constant 9.765625E-4 : f32
    %6 = vector.broadcast %cst_2 : f32 to vector<2x1xf32>
    %7 = arith.mulf %2, %6 : vector<2x1xf32>
    %cst_3 = arith.constant 9.765625E-4 : f32
    %8 = vector.broadcast %cst_3 : f32 to vector<2x1xf32>
    %9 = arith.mulf %5, %8 : vector<2x1xf32>
    %10 = arith.mulf %7, %7 : vector<2x1xf32>
    %11 = arith.subf %9, %10 : vector<2x1xf32>
    %cst_4 = arith.constant 0.000000e+00 : f32
    %12 = vector.broadcast %cst_4 : f32 to vector<2x1xf32>
    %13 = arith.maximumf %11, %12 : vector<2x1xf32>
    %cst_5 = arith.constant 9.99999974E-6 : f32
    %14 = vector.broadcast %cst_5 : f32 to vector<2x1xf32>
    %15 = arith.addf %13, %14 : vector<2x1xf32>
    %16 = math.rsqrt %15 : vector<2x1xf32>
    %c0_6 = arith.constant 0 : index
    %c0_7 = arith.constant 0 : index
    %17 = vector.load %arg2[%c0_6, %c0_7] : memref<1x1024xf32, #tpu.memory_space<vmem>>, vector<1x1024xf32>
    %c0_8 = arith.constant 0 : index
    %c0_9 = arith.constant 0 : index
    %18 = vector.load %arg3[%c0_8, %c0_9] : memref<1x1024xf32, #tpu.memory_space<vmem>>, vector<1x1024xf32>
    %19 = vector.broadcast %7 : vector<2x1xf32> to vector<2x1024xf32>
    %20 = arith.subf %0, %19 : vector<2x1024xf32>
    %21 = vector.broadcast %16 : vector<2x1xf32> to vector<2x1024xf32>
    %22 = arith.mulf %20, %21 : vector<2x1024xf32>
    %23 = vector.broadcast %17 : vector<1x1024xf32> to vector<2x1024xf32>
    %24 = arith.mulf %22, %23 : vector<2x1024xf32>
    %25 = vector.broadcast %18 : vector<1x1024xf32> to vector<2x1024xf32>
    %26 = arith.addf %24, %25 : vector<2x1024xf32>
    %c0_10 = arith.constant 0 : index
    %c0_11 = arith.constant 0 : index
    %27 = vector.load %arg4[%c0_10, %c0_11] : memref<2x1024xf32, #tpu.memory_space<vmem>>, vector<2x1024xf32>
    tpu.vector_store %arg4[%c0_10, %c0_11], %26 {strides = array<i32>} : memref<2x1024xf32, #tpu.memory_space<vmem>>, vector<2x1024xf32>,
    return
  }
  func.func @transform_0(%arg0: i32) -> (i32, i32) {
    %c0_i32 = arith.constant 0 : i32
    %c0_i32_0 = arith.constant 0 : i32
    return %arg0, %c0_i32 : i32, i32
  }
  func.func @transform_1(%arg0: i32) -> (i32, i32) {
    %c0_i32 = arith.constant 0 : i32
    %c0_i32_0 = arith.constant 0 : i32
    %c0_i32_1 = arith.constant 0 : i32
    return %c0_i32, %c0_i32_0 : i32, i32
  }
  func.func @transform_2(%arg0: i32) -> (i32, i32) {
    %c0_i32 = arith.constant 0 : i32
    %c0_i32_0 = arith.constant 0 : i32
    %c0_i32_1 = arith.constant 0 : i32
    return %c0_i32, %c0_i32_0 : i32, i32
  }
  func.func @transform_3(%arg0: i32) -> (i32, i32) {
    %c0_i32 = arith.constant 0 : i32
    %c0_i32_0 = arith.constant 0 : i32
    return %arg0, %c0_i32 : i32, i32
  }
}

</mosaic_0001>

<llo_original>
// kernel: tpu_custom_call.1
$region0: #{tpu_custom_call.1}
  #allocation0 [shape = 'u32[]', space=smem, size = 0x4, offset = 0x4, fixed_abs, tag = 'smem constant byte address 0x4 - core index']
  #allocation1 [shape = 'u32[144,128]{1,0:T(1,128)}', space=vmem, size = 0x12000, scoped, tag = 'internal scratch']
  %s0 = inlined_call_operand.hbm [shape: f32[2,1024], index: 0, kind: input, shape index: {}]
  %s1 = inlined_call_operand.hbm [shape: f32[1,1024], index: 1, kind: input, shape index: {}]
  %s2 = inlined_call_operand.hbm [shape: f32[1,1024], index: 2, kind: input, shape index: {}]
  %s3 = inlined_call_operand.hbm [shape: f32[2,1024], index: 3, kind: output, shape index: {}]
  %s4 = sld [smem:[#allocation0]]
  $region34: #{tpu_custom_call.1} parent=0
    _
  %s6 = ssub.s32 1, %s4
  %s7 = scalar_select 0, %s6, %s4
  $region1: #{tpu_custom_call.1} parent=0
    #allocation2 [shape = 'u8[8192]{0}', space=vmem, size = 0x2000, scoped, tag = 'input window, operand 0, single buffered']
    #allocation3 [shape = 's32[1]{0}', space=sflag, size = 0x4, scoped, tag = 'scoped memory for tpu_custom_call.1']
    #allocation4 [shape = 's32[1]{0}', space=sflag, size = 0x4, scoped, tag = 'scoped memory for tpu_custom_call.1']
    #allocation5 [shape = 'u8[4096]{0}', space=vmem, size = 0x1000, scoped, tag = 'input window, operand 1, single buffered']
    #allocation6 [shape = 's32[1]{0}', space=sflag, size = 0x4, scoped, tag = 'scoped memory for tpu_custom_call.1']
    #allocation7 [shape = 'u8[4096]{0}', space=vmem, size = 0x1000, scoped, tag = 'input window, operand 2, single buffered']
    #allocation8 [shape = 'u8[8192]{0}', space=vmem, size = 0x2000, scoped, tag = 'output window, operand 0, single buffered']
    %8 = vsyncpa [#allocation3], 0
    %9 = vsyncpa [#allocation6], 0
    %10 = vsyncpa [#allocation4], 0
    // Predicated region
    $region2: #{tpu_custom_call.1} parent=1 // pred_check
      _
    $region3: #{tpu_custom_call.1} parent=1 // pred_check_branch
      %12 = sbr.rel (0) target = $region5
    $region4: #{tpu_custom_call.1} parent=1 // pred_region
      %s14 = ssub.s32 256, 256
      %15 = vsyncadd [#allocation3], %s14
      %s17 = sshll.u32 [#allocation2], 4
      %s18 = int_to_ptr.vmem [resolvable:$true] %s17
      %20 = dma.hbm_to_vmem [thread:$0]  %s0, 256, %s18, [#allocation3]
    $region5: #{tpu_custom_call.1} parent=1 // pred_fallthru
      _
    // Predicated region
    $region6: #{tpu_custom_call.1} parent=1 // pred_check
      _
    $region7: #{tpu_custom_call.1} parent=1 // pred_check_branch
      %22 = sbr.rel (0) target = $region9
    $region8: #{tpu_custom_call.1} parent=1 // pred_region
      %s24 = ssub.s32 128, 128
      %25 = vsyncadd [#allocation6], %s24
      %s27 = sshll.u32 [#allocation5], 4
      %s28 = int_to_ptr.vmem [resolvable:$true] %s27
      %30 = dma.hbm_to_vmem [thread:$0]  %s1, 128, %s28, [#allocation6]
    $region9: #{tpu_custom_call.1} parent=1 // pred_fallthru
      _
    // Predicated region
    $region10: #{tpu_custom_call.1} parent=1 // pred_check
      _
    $region11: #{tpu_custom_call.1} parent=1 // pred_check_branch
      %32 = sbr.rel (0) target = $region13
    $region12: #{tpu_custom_call.1} parent=1 // pred_region
      %s34 = ssub.s32 128, 128
      %35 = vsyncadd [#allocation6], %s34
      %s37 = sshll.u32 [#allocation7], 4
      %s38 = int_to_ptr.vmem [resolvable:$true] %s37
      %40 = dma.hbm_to_vmem [thread:$0]  %s2, 128, %s38, [#allocation6]
    $region13: #{tpu_custom_call.1} parent=1 // pred_fallthru
      _
    // Predicated region
    $region14: #{tpu_custom_call.1} parent=1 // pred_check
      _
    $region15: #{tpu_custom_call.1} parent=1 // pred_check_branch
      %42 = sbr.rel (0) target = $region17
    $region16: #{tpu_custom_call.1} parent=1 // pred_region
      %43 = dma.done [#allocation3], 256
    $region17: #{tpu_custom_call.1} parent=1 // pred_fallthru
      _
    // Predicated region
    $region18: #{tpu_custom_call.1} parent=1 // pred_check
      _
    $region19: #{tpu_custom_call.1} parent=1 // pred_check_branch
      %45 = sbr.rel (0) target = $region21
    $region20: #{tpu_custom_call.1} parent=1 // pred_region
      %46 = dma.done [#allocation6], 128
    $region21: #{tpu_custom_call.1} parent=1 // pred_fallthru
      _
    // Predicated region
    $region22: #{tpu_custom_call.1} parent=1 // pred_check
      _
    $region23: #{tpu_custom_call.1} parent=1 // pred_check_branch
      %48 = sbr.rel (0) target = $region25
    $region24: #{tpu_custom_call.1} parent=1 // pred_region
      %49 = dma.done [#allocation6], 128
    $region25: #{tpu_custom_call.1} parent=1 // pred_fallthru
      _
    %v50 = vld [vmem:[#allocation2] sm:$0xff]
    %v51 = vld [vmem:[#allocation2 + $0x8] sm:$0xff]
    %v54 = vcombine.high %v50, %v50
    %v56 = vunpack.c.l.s4 1983009808
    %v57 = vunpack.c.0.s8 %v56
    %v58 = vlaneseq
    %v59 = vshrl.u32 %v58, 7
    %v60 = vsub.s32 %v57, %v59
    %v61 = vrot.slane %v50, %v60
    %v63 = vunpack.c.l.s4 1983009808
    %v64 = vunpack.c.0.s8 %v63
    %v65 = vlaneseq
    %v66 = vshrl.u32 %v65, 7
    %v67 = vsub.s32 %v64, %v66
    %v68 = vrot.slane %v54, %v67
    %v69 = vcombine.high %v61, %v61
    %v70 = vcombine.high %v68, %v68
    %v71 = vcombine.high %v51, %v51
    %v73 = vunpack.c.l.s4 1983009808
    %v74 = vunpack.c.0.s8 %v73
    %v75 = vlaneseq
    %v76 = vshrl.u32 %v75, 7
    %v77 = vsub.s32 %v74, %v76
    %v78 = vrot.slane %v51, %v77
    %v80 = vunpack.c.l.s4 1983009808
    %v81 = vunpack.c.0.s8 %v80
    %v82 = vlaneseq
    %v83 = vshrl.u32 %v82, 7
    %v84 = vsub.s32 %v81, %v83
    %v85 = vrot.slane %v71, %v84
    %v86 = vcombine.high %v78, %v78
    %v87 = vcombine.high %v85, %v85
    %vm96 = vcmask 1041408
    %v97 = vsel %vm96, %v61, 0.0
    %v98 = vsel %vm96, %v69, 0.0
    %v99 = vadd.f32 %v97, %v98
    %v100 = vsel %vm96, %v68, 0.0
    %v101 = vadd.f32 %v99, %v100
    %v102 = vsel %vm96, %v70, 0.0
    %v103 = vadd.f32 %v101, %v102
    %v104 = vsel %vm96, %v78, 0.0
    %v105 = vadd.f32 %v103, %v104
    %v106 = vsel %vm96, %v86, 0.0
    %v107 = vadd.f32 %v105, %v106
    %v108 = vsel %vm96, %v85, 0.0
    %v109 = vadd.f32 %v107, %v108
    %v110 = vsel %vm96, %v87, 0.0
    %v111 = vadd.f32 %v109, %v110
    %112 = vadd.xlane.f32.xlu0 %v111
    %v113 = vpop.xlane.xlu0 %112
    %v114 = vmul.f32 %v50, %v50
    %v115 = vmul.f32 %v51, %v51
    %v118 = vcombine.high %v114, %v114
    %v120 = vunpack.c.l.s4 1983009808
    %v121 = vunpack.c.0.s8 %v120
    %v122 = vlaneseq
    %v123 = vshrl.u32 %v122, 7
    %v124 = vsub.s32 %v121, %v123
    %v125 = vrot.slane %v114, %v124
    %v127 = vunpack.c.l.s4 1983009808
    %v128 = vunpack.c.0.s8 %v127
    %v129 = vlaneseq
    %v130 = vshrl.u32 %v129, 7
    %v131 = vsub.s32 %v128, %v130
    %v132 = vrot.slane %v118, %v131
    %v133 = vcombine.high %v125, %v125
    %v134 = vcombine.high %v132, %v132
    %v135 = vcombine.high %v115, %v115
    %v137 = vunpack.c.l.s4 1983009808
    %v138 = vunpack.c.0.s8 %v137
    %v139 = vlaneseq
    %v140 = vshrl.u32 %v139, 7
    %v141 = vsub.s32 %v138, %v140
    %v142 = vrot.slane %v115, %v141
    %v144 = vunpack.c.l.s4 1983009808
    %v145 = vunpack.c.0.s8 %v144
    %v146 = vlaneseq
    %v147 = vshrl.u32 %v146, 7
    %v148 = vsub.s32 %v145, %v147
    %v149 = vrot.slane %v135, %v148
    %v150 = vcombine.high %v142, %v142
    %v151 = vcombine.high %v149, %v149
    %v160 = vsel %vm96, %v125, 0.0
    %v161 = vsel %vm96, %v133, 0.0
    %v162 = vadd.f32 %v160, %v161
    %v163 = vsel %vm96, %v132, 0.0
    %v164 = vadd.f32 %v162, %v163
    %v165 = vsel %vm96, %v134, 0.0
    %v166 = vadd.f32 %v164, %v165
    %v167 = vsel %vm96, %v142, 0.0
    %v168 = vadd.f32 %v166, %v167
    %v169 = vsel %vm96, %v150, 0.0
    %v170 = vadd.f32 %v168, %v169
    %v171 = vsel %vm96, %v149, 0.0
    %v172 = vadd.f32 %v170, %v171
    %v173 = vsel %vm96, %v151, 0.0
    %v174 = vadd.f32 %v172, %v173
    %175 = vadd.xlane.f32.xlu0 %v174
    %v176 = vpop.xlane.xlu0 %175
    %v177 = vmul.f32 %v113, 0.0009765625
    %v178 = vmul.f32 %v176, 0.0009765625
    %v179 = vmul.f32 %v177, %v177
    %v180 = vsub.f32 %v178, %v179
    %v181 = vmax.f32 %v180, 0.0
    %v182 = vadd.f32 %v181, 1e-05
    %v183 = vrsqrt.pop %v182
    %v184 = vld [vmem:[#allocation5] sm:$0xff]
    %v185 = vld [vmem:[#allocation7] sm:$0xff]
    %v188 = vunpack.c.l.s4 269488144
    %v189 = vunpack.c.0.s8 %v188
    %v190 = vlaneseq
    %v191 = vshrl.u32 %v190, 7
    %v192 = vsub.s32 %v189, %v191
    %v193 = vrot.slane %v177, %v192
    %v195 = vsub.f32 %v50, %v193
    %v196 = vsub.f32 %v51, %v193
    %v199 = vunpack.c.l.s4 269488144
    %v200 = vunpack.c.0.s8 %v199
    %v201 = vlaneseq
    %v202 = vshrl.u32 %v201, 7
    %v203 = vsub.s32 %v200, %v202
    %v204 = vrot.slane %v183, %v203
    %v206 = vmul.f32 %v195, %v204
    %v207 = vmul.f32 %v196, %v204
    %v209 = vlaneseq
    %v210 = vshrl.u32 %v209, 7
    %v211 = vsub.s32 0, %v210
    %v212 = vrot.slane %v184, %v211
    %v213 = vlaneseq
    %v214 = vshrl.u32 %v213, 7
    %v215 = vsub.s32 1, %v214
    %v216 = vrot.slane %v184, %v215
    %v217 = vlaneseq
    %v218 = vshrl.u32 %v217, 7
    %v219 = vsub.s32 2, %v218
    %v220 = vrot.slane %v184, %v219
    %v221 = vlaneseq
    %v222 = vshrl.u32 %v221, 7
    %v223 = vsub.s32 3, %v222
    %v224 = vrot.slane %v184, %v223
    %v225 = vlaneseq
    %v226 = vshrl.u32 %v225, 7
    %v227 = vsub.s32 4, %v226
    %v228 = vrot.slane %v184, %v227
    %v229 = vlaneseq
    %v230 = vshrl.u32 %v229, 7
    %v231 = vsub.s32 5, %v230
    %v232 = vrot.slane %v184, %v231
    %v233 = vlaneseq
    %v234 = vshrl.u32 %v233, 7
    %v235 = vsub.s32 6, %v234
    %v236 = vrot.slane %v184, %v235
    %v237 = vlaneseq
    %v238 = vshrl.u32 %v237, 7
    %v239 = vsub.s32 7, %v238
    %v240 = vrot.slane %v184, %v239
    %v241 = vcombine.low %v212, %v216
    %v242 = vcombine.low %v220, %v224
    %v244 = vunpack.c.l.s4 1983009808
    %v245 = vunpack.c.0.s8 %v244
    %v246 = vlaneseq
    %v247 = vshrl.u32 %v246, 7
    %v248 = vsub.s32 %v245, %v247
    %v249 = vrot.slane %v241, %v248
    %v251 = vunpack.c.l.s4 1983009808
    %v252 = vunpack.c.0.s8 %v251
    %v253 = vlaneseq
    %v254 = vshrl.u32 %v253, 7
    %v255 = vsub.s32 %v252, %v254
    %v256 = vrot.slane %v242, %v255
    %v257 = vcombine.low %v249, %v256
    %v258 = vcombine.low %v228, %v232
    %v259 = vcombine.low %v236, %v240
    %v261 = vunpack.c.l.s4 1983009808
    %v262 = vunpack.c.0.s8 %v261
    %v263 = vlaneseq
    %v264 = vshrl.u32 %v263, 7
    %v265 = vsub.s32 %v262, %v264
    %v266 = vrot.slane %v258, %v265
    %v268 = vunpack.c.l.s4 1983009808
    %v269 = vunpack.c.0.s8 %v268
    %v270 = vlaneseq
    %v271 = vshrl.u32 %v270, 7
    %v272 = vsub.s32 %v269, %v271
    %v273 = vrot.slane %v259, %v272
    %v274 = vcombine.low %v266, %v273
    %v277 = vmul.f32 %v206, %v257
    %v278 = vmul.f32 %v207, %v274
    %v280 = vlaneseq
    %v281 = vshrl.u32 %v280, 7
    %v282 = vsub.s32 0, %v281
    %v283 = vrot.slane %v185, %v282
    %v284 = vlaneseq
    %v285 = vshrl.u32 %v284, 7
    %v286 = vsub.s32 1, %v285
    %v287 = vrot.slane %v185, %v286
    %v288 = vlaneseq
    %v289 = vshrl.u32 %v288, 7
    %v290 = vsub.s32 2, %v289
    %v291 = vrot.slane %v185, %v290
    %v292 = vlaneseq
    %v293 = vshrl.u32 %v292, 7
    %v294 = vsub.s32 3, %v293
    %v295 = vrot.slane %v185, %v294
    %v296 = vlaneseq
    %v297 = vshrl.u32 %v296, 7
    %v298 = vsub.s32 4, %v297
    %v299 = vrot.slane %v185, %v298
    %v300 = vlaneseq
    %v301 = vshrl.u32 %v300, 7
    %v302 = vsub.s32 5, %v301
    %v303 = vrot.slane %v185, %v302
    %v304 = vlaneseq
    %v305 = vshrl.u32 %v304, 7
    %v306 = vsub.s32 6, %v305
    %v307 = vrot.slane %v185, %v306
    %v308 = vlaneseq
    %v309 = vshrl.u32 %v308, 7
    %v310 = vsub.s32 7, %v309
    %v311 = vrot.slane %v185, %v310
    %v312 = vcombine.low %v283, %v287
    %v313 = vcombine.low %v291, %v295
    %v315 = vunpack.c.l.s4 1983009808
    %v316 = vunpack.c.0.s8 %v315
    %v317 = vlaneseq
    %v318 = vshrl.u32 %v317, 7
    %v319 = vsub.s32 %v316, %v318
    %v320 = vrot.slane %v312, %v319
    %v322 = vunpack.c.l.s4 1983009808
    %v323 = vunpack.c.0.s8 %v322
    %v324 = vlaneseq
    %v325 = vshrl.u32 %v324, 7
    %v326 = vsub.s32 %v323, %v325
    %v327 = vrot.slane %v313, %v326
    %v328 = vcombine.low %v320, %v327
    %v329 = vcombine.low %v299, %v303
    %v330 = vcombine.low %v307, %v311
    %v332 = vunpack.c.l.s4 1983009808
    %v333 = vunpack.c.0.s8 %v332
    %v334 = vlaneseq
    %v335 = vshrl.u32 %v334, 7
    %v336 = vsub.s32 %v333, %v335
    %v337 = vrot.slane %v329, %v336
    %v339 = vunpack.c.l.s4 1983009808
    %v340 = vunpack.c.0.s8 %v339
    %v341 = vlaneseq
    %v342 = vshrl.u32 %v341, 7
    %v343 = vsub.s32 %v340, %v342
    %v344 = vrot.slane %v330, %v343
    %v345 = vcombine.low %v337, %v344
    %v348 = vadd.f32 %v277, %v328
    %v349 = vadd.f32 %v278, %v345
    %350 = vst [vmem:[#allocation8] sm:$0xff] %v348
    %351 = vst [vmem:[#allocation8 + $0x8] sm:$0xff] %v349
    // Predicated region
    $region26: #{tpu_custom_call.1} parent=1 // pred_check
      _
    $region27: #{tpu_custom_call.1} parent=1 // pred_check_branch
      %353 = sbr.rel (0) target = $region29
    $region28: #{tpu_custom_call.1} parent=1 // pred_region
      %s355 = ssub.s32 256, 256
      %356 = vsyncadd [#allocation4], %s355
      %s358 = sshll.u32 [#allocation8], 4
      %s359 = int_to_ptr.vmem [resolvable:$true] %s358
      %361 = dma.vmem_to_hbm [thread:$0]  %s359, 256, %s3, [#allocation4]
    $region29: #{tpu_custom_call.1} parent=1 // pred_fallthru
      _
    // Predicated region
    $region30: #{tpu_custom_call.1} parent=1 // pred_check
      _
    $region31: #{tpu_custom_call.1} parent=1 // pred_check_branch
      %363 = sbr.rel (0) target = $region33
    $region32: #{tpu_custom_call.1} parent=1 // pred_region
      %364 = dma.done [#allocation4], 256
    $region33: #{tpu_custom_call.1} parent=1 // pred_fallthru
      _
    %365 = vsyncpa [#allocation3], 1
    %366 = vsyncpa [#allocation6], 1
    %367 = vsyncpa [#allocation4], 1

</llo_original>
